<compile_context>
chip_gen: v7x
topology: tpu7x:2x2x1
jax: 0.10.0
libtpu: 0.0.40
codegen_flags: <defaults>
</compile_context>

<pallas_src>
import functools

import jax
import jax.numpy as jnp
from jax.experimental import pallas as pl
from jax.experimental.pallas import tpu as pltpu


def _next_pow2(n: int) -> int:
    return 1 if n <= 1 else 1 << (int(n) - 1).bit_length()


def _round_up(n: int, m: int) -> int:
    return ((n + m - 1) // m) * m


def _vmem_capacity_bytes() -> int:
    """Physical VMEM per core; conservative 64 MiB fallback (v7x-sized)."""
    try:
        cap = int(getattr(pltpu.get_tpu_info(), "vmem_capacity_bytes", 0))
    except Exception:
        cap = 0
    return cap if cap > 0 else 64 * 1024 * 1024


def _tdnn_fused_kernel(xm_ref, xh_ref, w_ref, b_ref, o_ref, win_ref, *,
                       taps, d_in, relu):
    """Fused-tap path: one (TT, ctx*D_in) x (ctx*D_in, D_out_pad) matmul.

    xm_ref:  (1, n_phase, TT, D_in)   main time window (phase-decomposed x)
    xh_ref:  (1, n_phase, H,  D_in)   halo rows following the main window
    w_ref:   (ctx*D_in, D_out_pad)    lane-fused conv weight
    b_ref:   (1, D_out_pad)           f32 bias
    o_ref:   (1, TT, D_out_pad)       output tile
    win_ref: (TT, ctx*D_in)           compute-dtype scratch (fused LHS)
    """
    tt = o_ref.shape[1]
    # Assemble the lane-fused window: tap k of output row t reads input row
    # t + off_k of its phase; rows beyond the main block come from the halo.
    for k, (phase, off) in enumerate(taps):
        col = k * d_in
        if off == 0:
            win_ref[:, col:col + d_in] = xm_ref[0, phase]
        else:
            if off < tt:
                win_ref[0:tt - off, col:col + d_in] = xm_ref[0, phase, off:tt, :]
            win_ref[tt - off:tt, col:col + d_in] = xh_ref[0, phase, 0:off, :]

    y = jnp.dot(win_ref[...], w_ref[...], preferred_element_type=jnp.float32)
    y = y + b_ref[...]
    if relu:
        y = jnp.maximum(y, 0.0)
    o_ref[0] = y.astype(o_ref.dtype)


def _tdnn_pertap_kernel(xm_ref, xh_ref, w_ref, b_ref, o_ref, win_ref, acc_ref,
                        *, taps, relu):
    """Per-tap path (D_in >= 128): ctx shifted matmuls, f32 accumulation.

    win_ref: (n_phase, TT + H, D_in) compute-dtype scratch (main ++ halo)
    acc_ref: (TT, D_out_pad)         f32 scratch accumulator
    """
    tt = o_ref.shape[1]
    win_ref[:, 0:tt, :] = xm_ref[0]
    win_ref[:, tt:, :] = xh_ref[0]

    for k, (phase, off) in enumerate(taps):
        xk = win_ref[phase, off:off + tt, :]
        part = jnp.dot(xk, w_ref[k], preferred_element_type=jnp.float32)
        if k == 0:
            acc_ref[...] = part + b_ref[...]     # bias folded into tap 0
        else:
            acc_ref[...] += part

    y = acc_ref[...]
    if relu:
        y = jnp.maximum(y, 0.0)
    o_ref[0] = y.astype(o_ref.dtype)


def tdnn_forward(x, mask, weight, bias, *, ctx_size, dilation=1, stride=1,
                 relu=True, compute_dtype=jnp.bfloat16, time_tile=512):
    """Pallas TDNN forward.

    x:      (B, T, D_in)
    mask:   (B, 1, T) bool (or None)
    weight: (D_out, D_in, ctx_size)   (PyTorch Conv1d layout)
    bias:   (D_out,)
    Returns (y, mask_out): y (B, T_out, D_out) in x.dtype, mask_out (B, 1, T_out).
    """
    B, T, D_in = x.shape
    D_out = weight.shape[0]
    assert weight.shape == (D_out, D_in, ctx_size)
    assert stride >= 1 and dilation >= 1

    sub = (ctx_size - 1) * dilation
    T_out = (T - dilation * (ctx_size - 1) - 1) // stride + 1
    assert T_out >= 1, "sequence too short for the context window"

    out_dtype = x.dtype
    compute_dtype = jnp.dtype(compute_dtype)
    min_sub = 16 if compute_dtype.itemsize == 2 else 8

    # Per-tap (phase, row offset): tap k of output row t reads input row
    # t*stride + k*dil == (t + q_k)*stride + r_k, i.e. contiguous row t + q_k
    # of the phase array for residue r_k (phase_r[b, u] = x[b, u*stride + r]).
    residues, taps = [], []
    for k in range(ctx_size):
        r = (k * dilation) % stride
        q = (k * dilation) // stride
        if r not in residues:
            residues.append(r)
        taps.append((residues.index(r), q))
    n_phase = len(residues)
    q_max = max(q for _, q in taps)

    fuse_taps = D_in < 128            # small contraction dim -> fuse the taps
    k_fused = ctx_size * D_in

    # Output lane padding: 256-aligned for the v6e/v7x 256x256 MXU when the
    # layer is large enough, 128 otherwise.
    d_out_pad = _round_up(D_out, 256) if D_out >= 256 else _round_up(D_out, 128)

    # Tile sizing: powers of two; the halo block size must divide the tile.
    halo = _next_pow2(max(min_sub, q_max))
    tt = _next_pow2(max(min_sub, min(int(time_tile), T_out)))
    tt = max(tt, halo)

    # Generation-aware VMEM policy.
    vmem_cap = _vmem_capacity_bytes()
    vmem_limit = min((vmem_cap * 3) // 4, 100 * 1024 * 1024)
    budget = max(vmem_limit - 6 * 1024 * 1024, vmem_limit // 2)

    cs = compute_dtype.itemsize
    osz = jnp.dtype(out_dtype).itemsize

    def vmem_bytes(tt_):
        main = n_phase * tt_ * D_in * cs
        hal = n_phase * halo * D_in * cs
        outb = tt_ * d_out_pad * osz
        bias_b = d_out_pad * 4
        if fuse_taps:
            wgt = k_fused * d_out_pad * cs
            scr = tt_ * _round_up(k_fused, 128) * cs
        else:
            wgt = ctx_size * D_in * d_out_pad * cs
            scr = n_phase * (tt_ + halo) * D_in * cs + tt_ * d_out_pad * 4
        # Inputs, outputs, weight and bias are all double-buffered by the
        # pipeline; scratch is single-buffered.
        return 2 * (main + hal + outb + wgt + bias_b) + scr

    while tt > halo and tt > min_sub and vmem_bytes(tt) > budget:
        tt //= 2

    n_tiles = int(pl.cdiv(T_out, tt))
    l_pad = n_tiles * tt + halo
    ratio = tt // halo                # halo-block index step (exact: halo | tt)

    # Phase decomposition of x (plain XLA).  stride == 1 -> single phase, no
    # stack (avoids an extra HBM materialization of the activations).
    phases = []
    for r in residues:
        ph = x[:, r::stride, :][:, :l_pad, :]
        if ph.shape[1] < l_pad:
            ph = jnp.pad(ph, ((0, 0), (0, l_pad - ph.shape[1]), (0, 0)))
        phases.append(ph.astype(compute_dtype))
    if n_phase == 1:
        p = phases[0][:, None, :, :]                  # (B, 1, l_pad, D_in)
    else:
        p = jnp.stack(phases, axis=1)                 # (B, n_phase, l_pad, D_in)

    # Weight -> compute dtype, lane-padded; bias -> (1, D_out_pad) f32.
    w = jnp.transpose(weight, (2, 1, 0))              # (ctx, D_in, D_out)
    w = jnp.pad(w, ((0, 0), (0, 0), (0, d_out_pad - D_out))).astype(compute_dtype)
    if fuse_taps:
        w = w.reshape(k_fused, d_out_pad)             # row k*D_in + c == w[o,c,k]
    b = jnp.pad(bias, (0, d_out_pad - D_out)).astype(jnp.float32).reshape(1, d_out_pad)

    if fuse_taps:
        kernel = functools.partial(_tdnn_fused_kernel, taps=tuple(taps),
                                   d_in=D_in, relu=relu)
        w_spec = pl.BlockSpec((k_fused, d_out_pad), lambda bb, j: (0, 0))
        scratch = [pltpu.VMEM((tt, k_fused), compute_dtype)]
    else:
        kernel = functools.partial(_tdnn_pertap_kernel, taps=tuple(taps),
                                   relu=relu)
        w_spec = pl.BlockSpec((ctx_size, D_in, d_out_pad),
                              lambda bb, j: (0, 0, 0))
        scratch = [pltpu.VMEM((n_phase, tt + halo, D_in), compute_dtype),
                   pltpu.VMEM((tt, d_out_pad), jnp.float32)]

    cost = pl.CostEstimate(
        flops=int(2 * B * n_tiles * tt * ctx_size * D_in * d_out_pad),
        transcendentals=0,
        bytes_accessed=int(p.size * p.dtype.itemsize
                           + w.size * w.dtype.itemsize
                           + B * n_tiles * tt * d_out_pad * osz),
    )

    y_pad = pl.pallas_call(
        kernel,
        out_shape=jax.ShapeDtypeStruct((B, n_tiles * tt, d_out_pad), out_dtype),
        grid_spec=pltpu.PrefetchScalarGridSpec(
            num_scalar_prefetch=0,
            grid=(B, n_tiles),
            in_specs=[
                # main window: rows [j*tt, (j+1)*tt) of every phase
                pl.BlockSpec((1, n_phase, tt, D_in),
                             lambda bb, j: (bb, 0, j, 0)),
                # halo: rows [(j+1)*tt, (j+1)*tt + halo)
                pl.BlockSpec((1, n_phase, halo, D_in),
                             lambda bb, j: (bb, 0, (j + 1) * ratio, 0)),
                # resident weight / bias
                w_spec,
                pl.BlockSpec((1, d_out_pad), lambda bb, j: (0, 0)),
            ],
            out_specs=pl.BlockSpec((1, tt, d_out_pad), lambda bb, j: (bb, j, 0)),
            scratch_shapes=scratch,
        ),
        compiler_params=pltpu.CompilerParams(
            dimension_semantics=("parallel", "parallel"),
            vmem_limit_bytes=int(vmem_limit),
        ),
        cost_estimate=cost,
    )(p, p, w, b)

    y = y_pad[:, :T_out, :D_out]

    # Mask subsampling (glue, plain JAX — matches create_outputs()).
    mask_out = None
    if mask is not None:
        m = mask
        if sub != 0:
            m = m[:, :, :-sub]
        mask_out = m[:, :, ::stride]

    return y, mask_out


def _reference(x, mask, weight, bias, *, ctx_size, dilation, stride, relu,
               compute_dtype):
    """Pure-JAX reference (mirrors torch Conv1d with the same input rounding)."""
    B, T, D_in = x.shape
    D_out = weight.shape[0]
    sub = (ctx_size - 1) * dilation
    T_out = (T - dilation * (ctx_size - 1) - 1) // stride + 1
    xc = x.astype(compute_dtype).astype(jnp.float32)
    wc = weight.astype(compute_dtype).astype(jnp.float32)
    y = jnp.zeros((B, T_out, D_out), jnp.float32) + bias.astype(jnp.float32)[None, None, :]
    for k in range(ctx_size):
        xk = xc[:, k * dilation: k * dilation + (T_out - 1) * stride + 1: stride, :]
        y = y + jnp.einsum("btc,oc->bto", xk, wc[:, :, k],
                           precision=jax.lax.Precision.HIGHEST)
    if relu:
        y = jnp.maximum(y, 0.0)
    m = mask
    if m is not None:
        if sub != 0:
            m = m[:, :, :-sub]
        m = m[:, :, ::stride]
    return y.astype(x.dtype), m


if __name__ == "__main__":
    configs = [
        # fused-tap path (D_in < 128), stride 1
        dict(B=2, T=16, idim=16, odim=32, ctx=5, dil=1, stride=1,
             cdt=jnp.bfloat16, tol=1e-3),
        # fused-tap path, stride/dilation (multi-phase)
        dict(B=1, T=41, idim=24, odim=20, ctx=3, dil=3, stride=2,
             cdt=jnp.bfloat16, tol=1e-3),
        # fused-tap path, f32 compute
        dict(B=2, T=16, idim=16, odim=32, ctx=5, dil=1, stride=1,
             cdt=jnp.float32, tol=1e-4),
        # per-tap path (D_in >= 128)
        dict(B=2, T=40, idim=128, odim=64, ctx=3, dil=1, stride=1,
             cdt=jnp.bfloat16, tol=1e-3),
    ]

    key = jax.random.PRNGKey(0)
    for i, cfg in enumerate(configs):
        key, kx, kw, kb = jax.random.split(key, 4)
        B, T, IDIM, ODIM = cfg["B"], cfg["T"], cfg["idim"], cfg["odim"]
        CTX, DIL, STRIDE = cfg["ctx"], cfg["dil"], cfg["stride"]

        x = jax.random.normal(kx, (B, T, IDIM), dtype=jnp.float32)
        mask = jnp.ones((B, 1, T), dtype=jnp.bool_)

        # Conv1d-style init: U(-sqrt(k), sqrt(k)), k = 1/(idim*ctx).
        bound = 1.0 / (IDIM * CTX) ** 0.5
        weight = jax.random.uniform(kw, (ODIM, IDIM, CTX), jnp.float32, -bound, bound)
        bias = jax.random.uniform(kb, (ODIM,), jnp.float32, -bound, bound)

        y, m_out = tdnn_forward(
            x, mask, weight, bias, ctx_size=CTX, dilation=DIL, stride=STRIDE,
            relu=True, compute_dtype=cfg["cdt"])
        y = jax.block_until_ready(y)

        y_ref, m_ref = _reference(
            x, mask, weight, bias, ctx_size=CTX, dilation=DIL, stride=STRIDE,
            relu=True, compute_dtype=cfg["cdt"])

        T_OUT = (T - DIL * (CTX - 1) - 1) // STRIDE + 1
        assert y.shape == (B, T_OUT, ODIM), (i, y.shape)
        assert m_out.shape == m_ref.shape, (i, m_out.shape)
        assert jnp.allclose(y, y_ref, atol=cfg["tol"], rtol=cfg["tol"]), (
            i, float(jnp.max(jnp.abs(y - y_ref))))
        assert bool(jnp.all(m_out == m_ref)), i

    print("KERNEL_OK")
</pallas_src>

<mosaic_0001>
module attributes {stable_mosaic.version = 11 : i64} {
  func.func @_tdnn_fused_kernel(%arg0: i32, %arg1: i32, %arg2: memref<1x1x16x16xbf16, #tpu.memory_space<vmem>>, %arg3: memref<1x1x16x16xbf16, #tpu.memory_space<vmem>>, %arg4: memref<80x128xbf16, #tpu.memory_space<vmem>>, %arg5: memref<1x128xf32, #tpu.memory_space<vmem>>, %arg6: memref<1x16x128xf32, #tpu.memory_space<vmem>>, %arg7: memref<16x80xbf16, #tpu.memory_space<vmem>>) attributes {dimension_semantics = [#tpu.dimension_semantics<parallel>, #tpu.dimension_semantics<parallel>], iteration_bounds = array<i64: 2, 1>, scalar_prefetch = 0 : i64, scratch_operands = 1 : i64, tpu.core_type = #tpu.core_type<tc>, window_params = [{transform_indices = @transform_0, window_bounds = array<i64: 1, 1, 16, 16>}, {transform_indices = @transform_1, window_bounds = array<i64: 1, 1, 16, 16>}, {pipeline_mode = #tpu.pipeline_mode<synchronous>, transform_indices = @transform_2, window_bounds = array<i64: 80, 128>}, {pipeline_mode = #tpu.pipeline_mode<synchronous>, transform_indices = @transform_3, window_bounds = array<i64: 1, 128>}, {transform_indices = @transform_4, window_bounds = array<i64: 1, 16, 128>}]} {
    %c0 = arith.constant 0 : index
    %c0_0 = arith.constant 0 : index
    %c0_1 = arith.constant 0 : index
    %c0_2 = arith.constant 0 : index
    %0 = vector.load %arg2[%c0, %c0_0, %c0_1, %c0_2] : memref<1x1x16x16xbf16, #tpu.memory_space<vmem>>, vector<1x1x16x16xbf16>
    %1 = vector.shape_cast %0 : vector<1x1x16x16xbf16> to vector<16x16xbf16>
    %c0_3 = arith.constant 0 : index
    %c0_4 = arith.constant 0 : index
    %2 = vector.load %arg7[%c0_3, %c0_4] : memref<16x80xbf16, #tpu.memory_space<vmem>>, vector<16x16xbf16>
    tpu.vector_store %arg7[%c0_3, %c0_4], %1 {strides = array<i32>} : memref<16x80xbf16, #tpu.memory_space<vmem>>, vector<16x16xbf16>,
    %c0_5 = arith.constant 0 : index
    %c0_6 = arith.constant 0 : index
    %c1 = arith.constant 1 : index
    %c0_7 = arith.constant 0 : index
    %3 = vector.load %arg2[%c0_5, %c0_6, %c1, %c0_7] : memref<1x1x16x16xbf16, #tpu.memory_space<vmem>>, vector<1x1x15x16xbf16>
    %4 = vector.shape_cast %3 : vector<1x1x15x16xbf16> to vector<15x16xbf16>
    %c0_8 = arith.constant 0 : index
    %c16 = arith.constant 16 : index
    %5 = vector.load %arg7[%c0_8, %c16] : memref<16x80xbf16, #tpu.memory_space<vmem>>, vector<15x16xbf16>
    tpu.vector_store %arg7[%c0_8, %c16], %4 {strides = array<i32>} : memref<16x80xbf16, #tpu.memory_space<vmem>>, vector<15x16xbf16>,
    %c0_9 = arith.constant 0 : index
    %c0_10 = arith.constant 0 : index
    %c0_11 = arith.constant 0 : index
    %c0_12 = arith.constant 0 : index
    %6 = vector.load %arg3[%c0_9, %c0_10, %c0_11, %c0_12] : memref<1x1x16x16xbf16, #tpu.memory_space<vmem>>, vector<1x1x1x16xbf16>
    %7 = vector.shape_cast %6 : vector<1x1x1x16xbf16> to vector<1x16xbf16>
    %c15 = arith.constant 15 : index
    %c16_13 = arith.constant 16 : index
    %8 = vector.load %arg7[%c15, %c16_13] : memref<16x80xbf16, #tpu.memory_space<vmem>>, vector<1x16xbf16>
    tpu.vector_store %arg7[%c15, %c16_13], %7 {strides = array<i32>} : memref<16x80xbf16, #tpu.memory_space<vmem>>, vector<1x16xbf16>,
    %c0_14 = arith.constant 0 : index
    %c0_15 = arith.constant 0 : index
    %c2 = arith.constant 2 : index
    %c0_16 = arith.constant 0 : index
    %9 = vector.load %arg2[%c0_14, %c0_15, %c2, %c0_16] : memref<1x1x16x16xbf16, #tpu.memory_space<vmem>>, vector<1x1x14x16xbf16>
    %10 = vector.shape_cast %9 : vector<1x1x14x16xbf16> to vector<14x16xbf16>
    %c0_17 = arith.constant 0 : index
    %c32 = arith.constant 32 : index
    %11 = vector.load %arg7[%c0_17, %c32] : memref<16x80xbf16, #tpu.memory_space<vmem>>, vector<14x16xbf16>
    tpu.vector_store %arg7[%c0_17, %c32], %10 {strides = array<i32>} : memref<16x80xbf16, #tpu.memory_space<vmem>>, vector<14x16xbf16>,
    %c0_18 = arith.constant 0 : index
    %c0_19 = arith.constant 0 : index
    %c0_20 = arith.constant 0 : index
    %c0_21 = arith.constant 0 : index
    %12 = vector.load %arg3[%c0_18, %c0_19, %c0_20, %c0_21] : memref<1x1x16x16xbf16, #tpu.memory_space<vmem>>, vector<1x1x2x16xbf16>
    %13 = vector.shape_cast %12 : vector<1x1x2x16xbf16> to vector<2x16xbf16>
    %c14 = arith.constant 14 : index
    %c32_22 = arith.constant 32 : index
    %14 = vector.load %arg7[%c14, %c32_22] : memref<16x80xbf16, #tpu.memory_space<vmem>>, vector<2x16xbf16>
    tpu.vector_store %arg7[%c14, %c32_22], %13 {strides = array<i32>} : memref<16x80xbf16, #tpu.memory_space<vmem>>, vector<2x16xbf16>,
    %c0_23 = arith.constant 0 : index
    %c0_24 = arith.constant 0 : index
    %c3 = arith.constant 3 : index
    %c0_25 = arith.constant 0 : index
    %15 = vector.load %arg2[%c0_23, %c0_24, %c3, %c0_25] : memref<1x1x16x16xbf16, #tpu.memory_space<vmem>>, vector<1x1x13x16xbf16>
    %16 = vector.shape_cast %15 : vector<1x1x13x16xbf16> to vector<13x16xbf16>
    %c0_26 = arith.constant 0 : index
    %c48 = arith.constant 48 : index
    %17 = vector.load %arg7[%c0_26, %c48] : memref<16x80xbf16, #tpu.memory_space<vmem>>, vector<13x16xbf16>
    tpu.vector_store %arg7[%c0_26, %c48], %16 {strides = array<i32>} : memref<16x80xbf16, #tpu.memory_space<vmem>>, vector<13x16xbf16>,
    %c0_27 = arith.constant 0 : index
    %c0_28 = arith.constant 0 : index
    %c0_29 = arith.constant 0 : index
    %c0_30 = arith.constant 0 : index
    %18 = vector.load %arg3[%c0_27, %c0_28, %c0_29, %c0_30] : memref<1x1x16x16xbf16, #tpu.memory_space<vmem>>, vector<1x1x3x16xbf16>
    %19 = vector.shape_cast %18 : vector<1x1x3x16xbf16> to vector<3x16xbf16>
    %c13 = arith.constant 13 : index
    %c48_31 = arith.constant 48 : index
    %20 = vector.load %arg7[%c13, %c48_31] : memref<16x80xbf16, #tpu.memory_space<vmem>>, vector<3x16xbf16>
    tpu.vector_store %arg7[%c13, %c48_31], %19 {strides = array<i32>} : memref<16x80xbf16, #tpu.memory_space<vmem>>, vector<3x16xbf16>,
    %c0_32 = arith.constant 0 : index
    %c0_33 = arith.constant 0 : index
    %c4 = arith.constant 4 : index
    %c0_34 = arith.constant 0 : index
    %21 = vector.load %arg2[%c0_32, %c0_33, %c4, %c0_34] : memref<1x1x16x16xbf16, #tpu.memory_space<vmem>>, vector<1x1x12x16xbf16>
    %22 = vector.shape_cast %21 : vector<1x1x12x16xbf16> to vector<12x16xbf16>
    %c0_35 = arith.constant 0 : index
    %c64 = arith.constant 64 : index
    %23 = vector.load %arg7[%c0_35, %c64] : memref<16x80xbf16, #tpu.memory_space<vmem>>, vector<12x16xbf16>
    tpu.vector_store %arg7[%c0_35, %c64], %22 {strides = array<i32>} : memref<16x80xbf16, #tpu.memory_space<vmem>>, vector<12x16xbf16>,
    %c0_36 = arith.constant 0 : index
    %c0_37 = arith.constant 0 : index
    %c0_38 = arith.constant 0 : index
    %c0_39 = arith.constant 0 : index
    %24 = vector.load %arg3[%c0_36, %c0_37, %c0_38, %c0_39] : memref<1x1x16x16xbf16, #tpu.memory_space<vmem>>, vector<1x1x4x16xbf16>
    %25 = vector.shape_cast %24 : vector<1x1x4x16xbf16> to vector<4x16xbf16>
    %c12 = arith.constant 12 : index
    %c64_40 = arith.constant 64 : index
    %26 = vector.load %arg7[%c12, %c64_40] : memref<16x80xbf16, #tpu.memory_space<vmem>>, vector<4x16xbf16>
    tpu.vector_store %arg7[%c12, %c64_40], %25 {strides = array<i32>} : memref<16x80xbf16, #tpu.memory_space<vmem>>, vector<4x16xbf16>,
    %c0_41 = arith.constant 0 : index
    %c0_42 = arith.constant 0 : index
    %27 = vector.load %arg7[%c0_41, %c0_42] : memref<16x80xbf16, #tpu.memory_space<vmem>>, vector<16x80xbf16>
    %c0_43 = arith.constant 0 : index
    %c0_44 = arith.constant 0 : index
    %28 = vector.load %arg4[%c0_43, %c0_44] : memref<80x128xbf16, #tpu.memory_space<vmem>>, vector<80x128xbf16>
    %cst = arith.constant dense<0.000000e+00> : vector<16x128xf32>
    %29 = tpu.matmul %27, %28, %cst {dimension_numbers = #tpu.dot_dimension_numbers<[1], [0], [0], [1], [0, 0, 1, 1], [], []>} : vector<16x80xbf16>, vector<80x128xbf16>, vector<16x128xf32> -> vector<16x128xf32>
    %c0_45 = arith.constant 0 : index
    %c0_46 = arith.constant 0 : index
    %30 = vector.load %arg5[%c0_45, %c0_46] : memref<1x128xf32, #tpu.memory_space<vmem>>, vector<1x128xf32>
    %31 = vector.broadcast %30 : vector<1x128xf32> to vector<16x128xf32>
    %32 = arith.addf %29, %31 : vector<16x128xf32>
    %cst_47 = arith.constant 0.000000e+00 : f32
    %33 = vector.broadcast %cst_47 : f32 to vector<16x128xf32>
    %34 = arith.maximumf %32, %33 : vector<16x128xf32>
    %c0_48 = arith.constant 0 : index
    %c0_49 = arith.constant 0 : index
    %c0_50 = arith.constant 0 : index
    %35 = vector.load %arg6[%c0_48, %c0_49, %c0_50] : memref<1x16x128xf32, #tpu.memory_space<vmem>>, vector<1x16x128xf32>
    %36 = vector.shape_cast %35 : vector<1x16x128xf32> to vector<16x128xf32>
    %37 = vector.shape_cast %34 : vector<16x128xf32> to vector<1x16x128xf32>
    tpu.vector_store %arg6[%c0_48, %c0_49, %c0_50], %37 {strides = array<i32>} : memref<1x16x128xf32, #tpu.memory_space<vmem>>, vector<1x16x128xf32>,
    return
  }
  func.func @transform_0(%arg0: i32, %arg1: i32) -> (i32, i32, i32, i32) {
    %c0_i32 = arith.constant 0 : i32
    %c0_i32_0 = arith.constant 0 : i32
    %c0_i32_1 = arith.constant 0 : i32
    return %arg0, %c0_i32, %arg1, %c0_i32_0 : i32, i32, i32, i32
  }
  func.func @transform_1(%arg0: i32, %arg1: i32) -> (i32, i32, i32, i32) {
    %c1_i32 = arith.constant 1 : i32
    %0 = arith.addi %arg1, %c1_i32 : i32
    %c1_i32_0 = arith.constant 1 : i32
    %1 = arith.muli %0, %c1_i32_0 : i32
    %c0_i32 = arith.constant 0 : i32
    %c0_i32_1 = arith.constant 0 : i32
    %c0_i32_2 = arith.constant 0 : i32
    return %arg0, %c0_i32, %1, %c0_i32_1 : i32, i32, i32, i32
  }
  func.func @transform_2(%arg0: i32, %arg1: i32) -> (i32, i32) {
    %c0_i32 = arith.constant 0 : i32
    %c0_i32_0 = arith.constant 0 : i32
    %c0_i32_1 = arith.constant 0 : i32
    return %c0_i32, %c0_i32_0 : i32, i32
  }
  func.func @transform_3(%arg0: i32, %arg1: i32) -> (i32, i32) {
    %c0_i32 = arith.constant 0 : i32
    %c0_i32_0 = arith.constant 0 : i32
    %c0_i32_1 = arith.constant 0 : i32
    return %c0_i32, %c0_i32_0 : i32, i32
  }
  func.func @transform_4(%arg0: i32, %arg1: i32) -> (i32, i32, i32) {
    %c0_i32 = arith.constant 0 : i32
    %c0_i32_0 = arith.constant 0 : i32
    return %arg0, %arg1, %c0_i32 : i32, i32, i32
  }
}

</mosaic_0001>

<llo_original>
// kernel: tpu_custom_call.1
$region0: #{tpu_custom_call.1}
  #allocation0 [shape = 'u32[]', space=smem, size = 0x4, offset = 0x4, fixed_abs, tag = 'smem constant byte address 0x4 - core index']
  #allocation1 [shape = 'u32[144,128]{1,0:T(1,128)}', space=vmem, size = 0x12000, scoped, tag = 'internal scratch']
  #allocation2 [shape = 'bf16[16,80]{1,0:T(16,128)(2,1)}', space=vmem, size = 0x1000, scoped, tag = 'scratch operand']
  %s0 = inlined_call_operand.vmem [shape: bf16[2,1,32,16], index: 0, kind: input, shape index: {}]
  %s1 = inlined_call_operand.vmem [shape: bf16[2,1,32,16], index: 1, kind: input, shape index: {}]
  %s2 = inlined_call_operand.vmem [shape: bf16[80,128], index: 2, kind: input, shape index: {}]
  %s3 = inlined_call_operand.vmem [shape: f32[1,128], index: 3, kind: input, shape index: {}]
  %s4 = inlined_call_operand.hbm [shape: f32[2,16,128], index: 4, kind: output, shape index: {}]
  %s5 = sld [smem:[#allocation0]]
  $region49: #{tpu_custom_call.1} parent=0
    _
  %s7 = ssub.s32 1, %s5
  %s8 = scalar_select 0, %s7, %s5
  $region1: #{tpu_custom_call.1} parent=0
    #allocation3 [shape = 'u8[16384]{0}', space=vmem, size = 0x4000, scoped, tag = 'output window, operand 0']
    #allocation4 [shape = 's32[2]{0}', space=sflag, size = 0x8, scoped, tag = 'scoped memory for tpu_custom_call.1']
    %9 = vsyncpa [#allocation4], 0
    %s10 = scalar_lea.sflag [#allocation4], 1
    %11 = vsyncpa %s10, 0
    loop: start=0, step=1, limit=4
    $region2: #{tpu_custom_call.1} parent=1 // loop_pre_header
      _
    $region3: #{tpu_custom_call.1} parent=1 // loop_header
      %s13 = sphi 0, %s17
      %p14 = scmp.ge.s32.totalorder %s13, 4
      %s20 = sphi 0, %s32
      %s21 = sphi 0, %s28
      %s22 = sphi 0, %s20
      %s23 = sphi 0, %s21
      %s24 = sphi 0, %s22
      %s25 = sphi 0, %s23
      %s37 = sphi 0, %s39
      %s40 = sphi 0, %s37
      %s41 = sphi 0, %s40
      %s57 = sphi 0, %s41
      %s67 = sphi 0, %s69
      %s70 = sphi 0, %s67
      %s71 = sphi 0, %s70
      %s87 = sphi 0, %s71
      %s91 = sphi 0, %s91
      %s93 = sphi 0, %s91
      %s94 = sphi 0, %s93
      %s108 = sphi 0, %s94
      %s112 = sphi 0, %s112
      %s114 = sphi 0, %s112
      %s115 = sphi 0, %s114
      %s129 = sphi 0, %s115
      %s137 = sphi 0, %s139
      %s140 = sphi 0, %s137
      %s141 = sphi 0, %s140
      %s157 = sphi 0, %s141
    $region4: #{tpu_custom_call.1} parent=1 // loop_header_branch
      %16 = sbr.rel (%p14) target = $region8
    $region5: #{tpu_custom_call.1} parent=1 // loop_body
      %s18 = ssub.s32 %s13, 1
      %s19 = ssub.s32 %s13, 2
      %s26 = sadd.s32 1, %s21
      %p27 = scmp.ge.s32.totalorder %s26, 1
      %s28 = scalar_select %p27, 0, %s26
      %s29 = sadd.s32 1, %s20
      %s30 = scalar_select %p27, %s29, %s20
      %p31 = scmp.ge.s32.totalorder %s30, 2
      %s32 = scalar_select %p31, 0, %s30
      %s33 = ssub.s32 %s20, %s32
      %s34 = ssub.s32 %s21, %s28
      %s35 = sor.u32 %s33, %s34
      %p36 = scmp.eq.s32.totalorder %s35, 0
      %s38 = sadd.s32 %s37, 1
      %s39 = scalar_select %p36, %s37, %s38
      %p42 = pneg %p36
      %p43 = scmp.eq.s32.totalorder %s13, 1
      %p44 = por %p42, %p43
      %p45 = scmp.ne.s32.totalorder %s37, %s40
      %p46 = scmp.eq.s32.totalorder %s13, 0
      %p47 = por %p45, %p46
      %p48 = scmp.ne.s32.totalorder %s37, %s40
      %p49 = scmp.eq.s32.totalorder %s18, 1
      %p50 = por %p48, %p49
      %p51 = scmp.ne.s32.totalorder %s40, %s41
      %p52 = scmp.eq.s32.totalorder %s18, 0
      %p53 = por %p51, %p52
      %p54 = scmp.ne.s32.totalorder %s40, %s41
      %p55 = scmp.eq.s32.totalorder %s19, 1
      %p56 = por %p54, %p55
      %p58 = scmp.ne.s32.totalorder %s41, %s57
      %p59 = scmp.eq.s32.totalorder %s19, 0
      %p60 = por %p58, %p59
      %s61 = sadd.s32 %s21, 1
      %s62 = sadd.s32 %s28, 1
      %s63 = ssub.s32 %s20, %s32
      %s64 = ssub.s32 %s61, %s62
      %s65 = sor.u32 %s63, %s64
      %p66 = scmp.eq.s32.totalorder %s65, 0
      %s68 = sadd.s32 %s67, 1
      %s69 = scalar_select %p66, %s67, %s68
      %p72 = pneg %p66
      %p73 = scmp.eq.s32.totalorder %s13, 1
      %p74 = por %p72, %p73
      %p75 = scmp.ne.s32.totalorder %s67, %s70
      %p76 = scmp.eq.s32.totalorder %s13, 0
      %p77 = por %p75, %p76
      %p78 = scmp.ne.s32.totalorder %s67, %s70
      %p79 = scmp.eq.s32.totalorder %s18, 1
      %p80 = por %p78, %p79
      %p81 = scmp.ne.s32.totalorder %s70, %s71
      %p82 = scmp.eq.s32.totalorder %s18, 0
      %p83 = por %p81, %p82
      %p84 = scmp.ne.s32.totalorder %s70, %s71
      %p85 = scmp.eq.s32.totalorder %s19, 1
      %p86 = por %p84, %p85
      %p88 = scmp.ne.s32.totalorder %s71, %s87
      %p89 = scmp.eq.s32.totalorder %s19, 0
      %p90 = por %p88, %p89
      %s92 = sadd.s32 %s91, 1
      %p95 = scmp.eq.s32.totalorder %s13, 1
      %p96 = scmp.ne.s32.totalorder %s91, %s93
      %p97 = scmp.eq.s32.totalorder %s13, 0
      %p98 = por %p96, %p97
      %p99 = scmp.ne.s32.totalorder %s91, %s93
      %p100 = scmp.eq.s32.totalorder %s18, 1
      %p101 = por %p99, %p100
      %p102 = scmp.ne.s32.totalorder %s93, %s94
      %p103 = scmp.eq.s32.totalorder %s18, 0
      %p104 = por %p102, %p103
      %p105 = scmp.ne.s32.totalorder %s93, %s94
      %p106 = scmp.eq.s32.totalorder %s19, 1
      %p107 = por %p105, %p106
      %p109 = scmp.ne.s32.totalorder %s94, %s108
      %p110 = scmp.eq.s32.totalorder %s19, 0
      %p111 = por %p109, %p110
      %s113 = sadd.s32 %s112, 1
      %p116 = scmp.eq.s32.totalorder %s13, 1
      %p117 = scmp.ne.s32.totalorder %s112, %s114
      %p118 = scmp.eq.s32.totalorder %s13, 0
      %p119 = por %p117, %p118
      %p120 = scmp.ne.s32.totalorder %s112, %s114
      %p121 = scmp.eq.s32.totalorder %s18, 1
      %p122 = por %p120, %p121
      %p123 = scmp.ne.s32.totalorder %s114, %s115
      %p124 = scmp.eq.s32.totalorder %s18, 0
      %p125 = por %p123, %p124
      %p126 = scmp.ne.s32.totalorder %s114, %s115
      %p127 = scmp.eq.s32.totalorder %s19, 1
      %p128 = por %p126, %p127
      %p130 = scmp.ne.s32.totalorder %s115, %s129
      %p131 = scmp.eq.s32.totalorder %s19, 0
      %p132 = por %p130, %p131
      %s133 = ssub.s32 %s20, %s32
      %s134 = ssub.s32 %s21, %s28
      %s135 = sor.u32 %s133, %s134
      %p136 = scmp.eq.s32.totalorder %s135, 0
      %s138 = sadd.s32 %s137, 1
      %s139 = scalar_select %p136, %s137, %s138
      %p142 = pneg %p136
      %p143 = scmp.eq.s32.totalorder %s13, 1
      %p144 = por %p142, %p143
      %p145 = scmp.ne.s32.totalorder %s137, %s140
      %p146 = scmp.eq.s32.totalorder %s13, 0
      %p147 = por %p145, %p146
      %p148 = scmp.ne.s32.totalorder %s137, %s140
      %p149 = scmp.eq.s32.totalorder %s18, 1
      %p150 = por %p148, %p149
      %p151 = scmp.ne.s32.totalorder %s140, %s141
      %p152 = scmp.eq.s32.totalorder %s18, 0
      %p153 = por %p151, %p152
      %p154 = scmp.ne.s32.totalorder %s140, %s141
      %p155 = scmp.eq.s32.totalorder %s19, 1
      %p156 = por %p154, %p155
      %p158 = scmp.ne.s32.totalorder %s141, %s157
      %p159 = scmp.eq.s32.totalorder %s19, 0
      %p160 = por %p158, %p159
      %p161 = scmp.le.s32.totalorder 1, %s13
      %p162 = scmp.lt.s32.totalorder %s13, 3
      %p163 = pnand %p161, %p162
      %p164 = pneg %p163
      // Predicated region
      $region9: #{tpu_custom_call.1} parent=5 // pred_check
        _
      $region10: #{tpu_custom_call.1} parent=5 // pred_check_branch
        %166 = sbr.rel (%p163) target = $region12
      $region11: #{tpu_custom_call.1} parent=5 // pred_region
        %s167 = ssub.s32 %s13, 1
        // Predicated region
        $region13: #{tpu_custom_call.1} parent=11 // pred_check
          %p168 = pneg %p104
        $region14: #{tpu_custom_call.1} parent=11 // pred_check_branch
          %170 = sbr.rel (%p168) target = $region16
        $region15: #{tpu_custom_call.1} parent=11 // pred_region
          _
        $region16: #{tpu_custom_call.1} parent=11 // pred_fallthru
          _
        // Predicated region
        $region17: #{tpu_custom_call.1} parent=11 // pred_check
          %p171 = pneg %p125
        $region18: #{tpu_custom_call.1} parent=11 // pred_check_branch
          %173 = sbr.rel (%p171) target = $region20
        $region19: #{tpu_custom_call.1} parent=11 // pred_region
          _
        $region20: #{tpu_custom_call.1} parent=11 // pred_fallthru
          _
      $region12: #{tpu_custom_call.1} parent=5 // pred_fallthru
        _
      %p174 = scmp.lt.s32.totalorder %s13, 2
      // Predicated region
      $region21: #{tpu_custom_call.1} parent=5 // pred_check
        %p175 = pneg %p174
      $region22: #{tpu_custom_call.1} parent=5 // pred_check_branch
        %177 = sbr.rel (%p175) target = $region24
      $region23: #{tpu_custom_call.1} parent=5 // pred_region
        // Predicated region
        $region25: #{tpu_custom_call.1} parent=23 // pred_check
          %p178 = pneg %p47
        $region26: #{tpu_custom_call.1} parent=23 // pred_check_branch
          %180 = sbr.rel (%p178) target = $region28
        $region27: #{tpu_custom_call.1} parent=23 // pred_region
          %s181 = smul.u32 2, %s21
          %p182 = scmp.lt.s32.totalorder %s20, 1
          %s183 = scalar_select %p182, %s20, 1
          %p184 = scmp.lt.s32.totalorder %s181, 3
          %s185 = scalar_select %p184, %s181, 3
          %s186 = smul.addr %s183, 4
          %s187 = sadd.s32 %s185, %s186
          %s188 = smul.addr %s187, 4
          %s189 = scalar_lea.vmem %s0, %s188
          %s190 = smul.u32 2, %s21
        $region28: #{tpu_custom_call.1} parent=23 // pred_fallthru
          _
        // Predicated region
        $region29: #{tpu_custom_call.1} parent=23 // pred_check
          %p191 = pneg %p77
        $region30: #{tpu_custom_call.1} parent=23 // pred_check_branch
          %193 = sbr.rel (%p191) target = $region32
        $region31: #{tpu_custom_call.1} parent=23 // pred_region
          %s194 = sadd.s32 %s21, 1
          %s195 = smul.u32 2, %s194
          %p196 = scmp.lt.s32.totalorder %s20, 1
          %s197 = scalar_select %p196, %s20, 1
          %p198 = scmp.lt.s32.totalorder %s195, 3
          %s199 = scalar_select %p198, %s195, 3
          %s200 = smul.addr %s197, 4
          %s201 = sadd.s32 %s199, %s200
          %s202 = smul.addr %s201, 4
          %s203 = scalar_lea.vmem %s1, %s202
          %s204 = sadd.s32 %s21, 1
          %s205 = smul.u32 2, %s204
        $region32: #{tpu_custom_call.1} parent=23 // pred_fallthru
          _
      $region24: #{tpu_custom_call.1} parent=5 // pred_fallthru
        _
      %p206 = scmp.le.s32.totalorder 1, %s13
      %p207 = scmp.lt.s32.totalorder %s13, 3
      %p208 = pnand %p206, %p207
      %p209 = pneg %p208
      // Predicated region
      $region33: #{tpu_custom_call.1} parent=5 // pred_check
        _
      $region34: #{tpu_custom_call.1} parent=5 // pred_check_branch
        %211 = sbr.rel (%p208) target = $region36
      $region35: #{tpu_custom_call.1} parent=5 // pred_region
        %s212 = ssub.s32 %s13, 1
        %s213 = smul.u32 2, %s23
        %p214 = scmp.lt.s32.totalorder %s22, 1
        %s215 = scalar_select %p214, %s22, 1
        %p216 = scmp.lt.s32.totalorder %s213, 3
        %s217 = scalar_select %p216, %s213, 3
        %s218 = smul.addr %s215, 4
        %s219 = sadd.s32 %s217, %s218
        %s220 = smul.addr %s219, 4
        %s221 = scalar_lea.vmem %s0, %s220
        %p222 = pneg %p53
        %p223 = pneg %p50
        %s224 = sadd.s32 %s23, 1
        %s225 = smul.u32 2, %s224
        %p226 = scmp.lt.s32.totalorder %s22, 1
        %s227 = scalar_select %p226, %s22, 1
        %p228 = scmp.lt.s32.totalorder %s225, 3
        %s229 = scalar_select %p228, %s225, 3
        %s230 = smul.addr %s227, 4
        %s231 = sadd.s32 %s229, %s230
        %s232 = smul.addr %s231, 4
        %s233 = scalar_lea.vmem %s1, %s232
        %p234 = pneg %p83
        %p235 = pneg %p80
        %p236 = pneg %p104
        %p237 = pneg %p101
        %p238 = pneg %p125
        %p239 = pneg %p122
        %p240 = pneg %p153
        %p241 = pneg %p150
        %s242 = sand.u32 %s140, 1
        %s243 = scalar_lea.sflag [#allocation4], %s242
        %s244 = sand.u32 %s140, 1
        %s245 = smul.addr %s244, 16
        %s246 = scalar_lea.vmem [#allocation3], %s245
        %s247 = smul.u32 2, %s23
        %p248 = scmp.lt.s32.totalorder %s22, 1
        %s249 = scalar_select %p248, %s22, 1
        %p250 = scmp.lt.s32.totalorder %s247, 3
        %s251 = scalar_select %p250, %s247, 3
        %s252 = smul.addr %s249, 4
        %s253 = sadd.s32 %s251, %s252
        %s254 = smul.addr %s253, 4
        %s255 = scalar_lea.vmem %s0, %s254
        %s256 = smul.u32 2, %s23
        %s257 = sadd.s32 %s23, 1
        %s258 = smul.u32 2, %s257
        %p259 = scmp.lt.s32.totalorder %s22, 1
        %s260 = scalar_select %p259, %s22, 1
        %p261 = scmp.lt.s32.totalorder %s258, 3
        %s262 = scalar_select %p261, %s258, 3
        %s263 = smul.addr %s260, 4
        %s264 = sadd.s32 %s262, %s263
        %s265 = smul.addr %s264, 4
        %s266 = scalar_lea.vmem %s1, %s265
        %s267 = sadd.s32 %s23, 1
        %s268 = smul.u32 2, %s267
        %s269 = smul.u32 2, %s23
        %v271 = vld [vmem:[%s255] sm:$0xf]
        %v272 = vld [vmem:[%s255 + $0x4] sm:$0xf]
        %v275 = vunpack.c.l.b16 %v271
        %v276 = vunpack.c.l.b16 %v272
        %v277 = vpack.c.b16 %v276, %v275
        %vm279 = vcmask 130048
        %280 = vst.msk [vmem:[#allocation2] sm:$0xff] %vm279, %v277
        %v281 = vld [vmem:[%s255] sm:$0xf]
        %v282 = vld [vmem:[%s255 + $0x4] sm:$0xf]
        %v285 = vunpack.c.l.b16 %v281
        %v286 = vunpack.c.l.b16 %v282
        %v287 = vpack.c.b16 %v286, %v285
        %v289 = vshrl.u32 %v287, 16
        %v291 = vshll.u32 %v287, 16
        %v293 = vrot.slane %v291, 1
        %v294 = vor.u32 %v289, %v293
        %295 = vrot.lane.b32.xlu0 %v294, 16
        %v296 = vpop.permute.xlu0 %295
        %vm298 = vcmask 261248
        %vm299 = vsmask.f32 7424
        %vm300 = vmand %vm298, %vm299
        %v301 = vld [vmem:[#allocation2] sm:$0xff]
        %v302 = vsel %vm300, %v296, %v301
        %303 = vst [vmem:[#allocation2] sm:$0xff] %v302
        %v304 = vld [vmem:[%s266] sm:$0x1]
        %v306 = vunpack.c.l.b16 %v304
        %v307 = vpack.c.b16 %v306, %v306
        %v309 = vshll.u32 %v307, 16
        %v311 = vrot.slane %v309, 1
        %312 = vrot.lane.b32.xlu0 %v311, 16
        %v313 = vpop.permute.xlu0 %312
        %vm315 = vcmask 261255
        %vm316 = vsmask.f32 7966
        %vm317 = vmand %vm315, %vm316
        %v318 = vld [vmem:[#allocation2] sm:$0x80]
        %v319 = vsel %vm317, %v313, %v318
        %320 = vst [vmem:[#allocation2] sm:$0x80] %v319
        %v321 = vld [vmem:[%s255] sm:$0xe]
        %v322 = vld [vmem:[%s255 + $0x4] sm:$0xf]
        %v325 = vunpack.c.l.b16 %v321
        %v326 = vunpack.c.l.b16 %v322
        %v327 = vpack.c.b16 %v326, %v325
        %v328 = vrot.slane %v327, 1
        %329 = vrot.lane.b32.xlu0 %v328, 32
        %v330 = vpop.permute.xlu0 %329
        %vm332 = vcmask 391424
        %333 = vst.msk [vmem:[#allocation2] sm:$0x7f] %vm332, %v330
        %v334 = vld [vmem:[%s266] sm:$0x1]
        %v336 = vunpack.c.l.b16 %v334
        %v337 = vpack.c.b16 %v336, %v336
        %v338 = vrot.slane %v337, 1
        %339 = vrot.lane.b32.xlu0 %v338, 32
        %v340 = vpop.permute.xlu0 %339
        %vm342 = vcmask 392455
        %343 = vst.msk [vmem:[#allocation2] sm:$0x80] %vm342, %v340
        %v344 = vld [vmem:[%s255] sm:$0xe]
        %v345 = vld [vmem:[%s255 + $0x4] sm:$0xf]
        %v348 = vunpack.c.l.b16 %v344
        %v349 = vunpack.c.l.b16 %v345
        %v350 = vpack.c.b16 %v349, %v348
        %v352 = vshrl.u32 %v350, 16
        %v354 = vrot.slane %v352, 1
        %v355 = vshll.u32 %v350, 16
        %v357 = vrot.slane %v355, 2
        %v358 = vor.u32 %v354, %v357
        %359 = vrot.lane.b32.xlu0 %v358, 48
        %v360 = vpop.permute.xlu0 %359
        %vm362 = vcmask 522624
        %vm363 = vsmask.f32 6400
        %vm364 = vmand %vm362, %vm363
        %v365 = vld [vmem:[#allocation2] sm:$0x7f]
        %v366 = vsel %vm364, %v360, %v365
        %367 = vst [vmem:[#allocation2] sm:$0x7f] %v366
        %v368 = vld [vmem:[%s266] sm:$0x3]
        %v370 = vunpack.c.l.b16 %v368
        %v371 = vpack.c.b16 %v370, %v370
        %v373 = vshrl.u32 %v371, 16
        %v375 = vrot.slane %v373, 1
        %v376 = vshll.u32 %v371, 16
        %v378 = vrot.slane %v376, 2
        %v379 = vor.u32 %v375, %v378
        %380 = vrot.lane.b32.xlu0 %v379, 48
        %v381 = vpop.permute.xlu0 %380
        %vm383 = vcmask 523654
        %vm384 = vsmask.f32 7962
        %vm385 = vmand %vm383, %vm384
        %v386 = vld [vmem:[#allocation2] sm:$0xc0]
        %v387 = vsel %vm385, %v381, %v386
        %388 = vst [vmem:[#allocation2] sm:$0xc0] %v387
        %v389 = vld [vmem:[%s255] sm:$0xc]
        %v390 = vld [vmem:[%s255 + $0x4] sm:$0xf]
        %v393 = vunpack.c.l.b16 %v389
        %v394 = vunpack.c.l.b16 %v390
        %v395 = vpack.c.b16 %v394, %v393
        %v396 = vrot.slane %v395, 2
        %397 = vrot.lane.b32.xlu0 %v396, 64
        %v398 = vpop.permute.xlu0 %397
        %vm400 = vcmask 652800
        %401 = vst.msk [vmem:[#allocation2] sm:$0x3f] %vm400, %v398
        %v402 = vld [vmem:[%s266] sm:$0x3]
        %v404 = vunpack.c.l.b16 %v402
        %v405 = vpack.c.b16 %v404, %v404
        %v406 = vrot.slane %v405, 2
        %407 = vrot.lane.b32.xlu0 %v406, 64
        %v408 = vpop.permute.xlu0 %407
        %vm410 = vcmask 654854
        %411 = vst.msk [vmem:[#allocation2] sm:$0xc0] %vm410, %v408
        %v412 = vld [vmem:[#allocation2] sm:$0xff]
        %v413 = vld [vmem:[%s2] sm:$0xf]
        %v414 = vld [vmem:[%s2 + $0x4] sm:$0xf]
        %v415 = vld [vmem:[%s2 + $0x8] sm:$0xf]
        %v416 = vld [vmem:[%s2 + $0xc] sm:$0xf]
        %v417 = vld [vmem:[%s2 + $0x10] sm:$0xf]
        %v418 = vld [vmem:[%s2 + $0x14] sm:$0xf]
        %v419 = vld [vmem:[%s2 + $0x18] sm:$0xf]
        %v420 = vld [vmem:[%s2 + $0x1c] sm:$0xf]
        %v421 = vld [vmem:[%s2 + $0x20] sm:$0xf]
        %v422 = vld [vmem:[%s2 + $0x24] sm:$0xf]
        %v423 = vld [vmem:[%s3] sm:$0x1]
        %v425 = vlaneseq
        %v426 = vshrl.u32 %v425, 7
        %v427 = vsub.s32 0, %v426
        %v428 = vrot.slane %v423, %v427
        %v440 = vunpack.c.l.b16 %v413
        %v441 = vunpack.c.l.b16 %v414
        %v442 = vunpack.c.l.b16 %v415
        %v443 = vunpack.c.l.b16 %v416
        %v444 = vunpack.c.l.b16 %v417
        %v445 = vunpack.c.l.b16 %v418
        %v446 = vunpack.c.l.b16 %v419
        %v447 = vunpack.c.l.b16 %v420
        %v448 = vunpack.c.l.b16 %v421
        %v449 = vunpack.c.l.b16 %v422
        %v450 = vpack.c.b16 %v441, %v440
        %v451 = vpack.c.b16 %v443, %v442
        %v452 = vpack.c.b16 %v445, %v444
        %v453 = vpack.c.b16 %v447, %v446
        %v454 = vpack.c.b16 %v449, %v448
        %vm460 = vcmask 654336
        %v462 = vsel %vm460, %v412, 0
        %464 = vmatprep.subr.bf16.mxu0 0
        %465 = vmatpush1.bf16.msra.mxu0 %v450
        %466 = vmatprep.subr.bf16.mxu0 0
        %467 = vmatpush1.bf16.msra.mxu0 %v451
        %468 = vmatprep.subr.bf16.mxu0 0
        %469 = vmatpush1.bf16.msra.mxu0 %v452
        %470 = vmatprep.subr.bf16.mxu0 0
        %471 = vmatpush1.bf16.msra.mxu0 %v453
        %472 = vmatprep.subr.bf16.mxu0 0
        %473 = vmatpush1.bf16.msra.mxu0 %v454
        %474 = vmatprep.subr.bf16.mxu0 0
        %475 = vmatpush1.bf16.msra.mxu0 0
        %476 = vmatprep.subr.bf16.mxu0 0
        %477 = vmatpush1.bf16.msra.mxu0 0
        %478 = vmatprep.subr.bf16.mxu0 0
        %479 = vmatpush1.bf16.msra.mxu0 0
        %480 = vmatprep.subr.bf16.mxu0 0
        %481 = vmatpush1.bf16.msra.mxu0 0
        %482 = vmatprep.subr.bf16.mxu0 0
        %483 = vmatpush1.bf16.msra.mxu0 0
        %484 = vmatprep.subr.bf16.mxu0 0
        %485 = vmatpush1.bf16.msra.mxu0 0
        %486 = vmatprep.subr.bf16.mxu0 0
        %487 = vmatpush1.bf16.msra.mxu0 0
        %488 = vmatprep.subr.bf16.mxu0 0
        %489 = vmatpush1.bf16.msra.mxu0 0
        %490 = vmatprep.subr.bf16.mxu0 0
        %491 = vmatpush1.bf16.msra.mxu0 0
        %492 = vmatprep.subr.bf16.mxu0 0
        %493 = vmatpush1.bf16.msra.mxu0 0
        %494 = vmatprep.subr.bf16.mxu0 0
        %495 = vmatpush1.bf16.msra.mxu0 0
        %496 = vmatprep.mubr.bf16.mxu0 0
        %497 = vmatmul.mubr.bf16.gmra.mrb[0].mxu0 %v462
        %v498 = vpop.f32.mrb[0].mxu0
        %v499 = vadd.f32 %v428, %v498
        %v500 = vpop.f32.mrb[0].mxu0
        %v501 = vpop.f32.mrb[0].mxu0
        %v502 = vadd.f32 %v428, %v501
        %v503 = vpop.f32.mrb[0].mxu0
        %504 = vdwg.mxu0
        %v505 = vmax.f32 %v499, 0.0
        %v506 = vmax.f32 %v502, 0.0
        %507 = vst [vmem:[%s246] sm:$0xff] %v505
        %508 = vst [vmem:[%s246 + $0x8] sm:$0xff] %v506
        %s509 = sand.u32 %s140, 1
        %s510 = scalar_lea.sflag [#allocation4], %s509
        %s511 = sand.u32 %s140, 1
        %s512 = smul.addr %s511, 16
        %s513 = scalar_lea.vmem [#allocation3], %s512
        // Predicated region
        $region37: #{tpu_custom_call.1} parent=35 // pred_check
          %p514 = pneg %p150
        $region38: #{tpu_custom_call.1} parent=35 // pred_check_branch
          %516 = sbr.rel (%p514) target = $region40
        $region39: #{tpu_custom_call.1} parent=35 // pred_region
          %s517 = smul.u32 2, %s23
          %s519 = ssub.s32 256, 256
          %520 = vsyncadd %s510, %s519
          %s521 = smul.addr %s22, 2
          %s522 = sadd.s32 %s517, %s521
          %s523 = smul.addr %s522, 128
          %s524 = scalar_lea.hbm %s4, %s523
          %s525 = sshll.u32 %s513, 4
          %s526 = int_to_ptr.vmem [resolvable:$true] %s525
          %531 = dma.vmem_to_hbm [thread:$0]  %s526, 256, %s524, %s510, 128, 128, 8
        $region40: #{tpu_custom_call.1} parent=35 // pred_fallthru
          _
      $region36: #{tpu_custom_call.1} parent=5 // pred_fallthru
        _
      %p532 = scmp.le.s32.totalorder 2, %s13
      // Predicated region
      $region41: #{tpu_custom_call.1} parent=5 // pred_check
        %p533 = pneg %p532
      $region42: #{tpu_custom_call.1} parent=5 // pred_check_branch
        %535 = sbr.rel (%p533) target = $region44
      $region43: #{tpu_custom_call.1} parent=5 // pred_region
        %s536 = ssub.s32 %s13, 2
        // Predicated region
        $region45: #{tpu_custom_call.1} parent=43 // pred_check
          %p537 = pneg %p156
        $region46: #{tpu_custom_call.1} parent=43 // pred_check_branch
          %539 = sbr.rel (%p537) target = $region48
        $region47: #{tpu_custom_call.1} parent=43 // pred_region
          %s540 = sand.u32 %s141, 1
          %s541 = scalar_lea.sflag [#allocation4], %s540
          %s542 = sand.u32 %s141, 1
          %s543 = smul.addr %s542, 16
          %s544 = scalar_lea.vmem [#allocation3], %s543
          %545 = dma.done %s541, 256
        $region48: #{tpu_custom_call.1} parent=43 // pred_fallthru
          _
      $region44: #{tpu_custom_call.1} parent=5 // pred_fallthru
        _
    $region6: #{tpu_custom_call.1} parent=1 // loop_footer
      %s17 = sadd.s32 1, %s13
    $region7: #{tpu_custom_call.1} parent=1 // loop_footer_branch
      %12 = sbr.rel target = $region3
    $region8: #{tpu_custom_call.1} parent=1 // loop_exit
      _
    %546 = vsyncpa [#allocation4], 1
    %s547 = scalar_lea.sflag [#allocation4], 1
    %548 = vsyncpa %s547, 1

</llo_original>
